<compile_context>
chip_gen: v5e
topology: v5e:2x2
jax: 0.10.0
libtpu: 0.0.40
codegen_flags: <defaults>
</compile_context>

<pallas_src>
import functools
import math

import jax
import jax.numpy as jnp
from jax.experimental import pallas as pl
from jax.experimental.pallas import tpu as pltpu


def _round_up(x, m):
    return ((x + m - 1) // m) * m


def _make_double_q_kernel(num_layers):
    """Kernel factory; num_layers = hidden_depth + 1 linear layers per net."""

    def kernel(obs_ref, act_ref, *refs):
        # refs = [w0_obs, w0_act, b0, (w_l, b_l) for l in 1..num_layers-1, q_out]
        q_ref = refs[-1]
        prefs = refs[:-1]

        obs = obs_ref[...]            # (TB, obs_dim) f32
        act = act_ref[...]            # (TB, act_dim) f32

        for n in range(2):            # static unroll over the two Q networks
            # First layer: folded concat -> two matmuls sharing the same tiles.
            h = (jnp.dot(obs, prefs[0][n], preferred_element_type=jnp.float32)
                 + jnp.dot(act, prefs[1][n], preferred_element_type=jnp.float32)
                 + prefs[2][n])                       # (TB, H) + (1, H)
            if num_layers > 1:
                h = jnp.maximum(h, 0.0)               # ReLU

            idx = 3
            for l in range(1, num_layers):
                w = prefs[idx][n]                     # (d_in, d_out)
                b = prefs[idx + 1][n]                 # (1, d_out)
                idx += 2
                h = jnp.dot(h, w, preferred_element_type=jnp.float32) + b
                if l < num_layers - 1:
                    h = jnp.maximum(h, 0.0)

            # Net n's scalar head -> column n of the fused (TB, 2) output.
            q_ref[:, n:n + 1] = h

    return kernel


@functools.partial(jax.jit, static_argnames=("block_b",))
def double_q_forward(obs, action, params, *, block_b=128):
    """Fused DoubleQCritic forward.

    obs:    (B, obs_dim) f32
    action: (B, action_dim) f32
    params: flat tuple, all stacked over the 2 networks and pre-transposed
            to right-multiplication layout (torch Linear weight.T):
              [0] w0_obs (2, obs_dim, H)     [1] w0_act (2, action_dim, H)
              [2] b0     (2, 1, H)
              then per remaining layer l:  w_l (2, d_in, d_out), b_l (2, 1, d_out)
            (last layer has d_out = 1)
    returns: (q1, q2), each (B, 1) float32
    """
    assert obs.shape[0] == action.shape[0]
    B = obs.shape[0]
    obs_dim = obs.shape[1]
    act_dim = action.shape[1]
    num_layers = 1 + (len(params) - 3) // 2

    obs = obs.astype(jnp.float32)
    action = action.astype(jnp.float32)
    params = tuple(p.astype(jnp.float32) for p in params)

    # Batch tiling: TB multiple of 8 (sublane rule), capped at block_b.
    tb = min(block_b, _round_up(B, 8))
    b_pad = _round_up(B, tb)
    if b_pad != B:
        obs = jnp.pad(obs, ((0, b_pad - B), (0, 0)))
        action = jnp.pad(action, ((0, b_pad - B), (0, 0)))

    grid = (b_pad // tb,)
    in_specs = [
        pl.BlockSpec((tb, obs_dim), lambda i: (i, 0)),
        pl.BlockSpec((tb, act_dim), lambda i: (i, 0)),
    ] + [
        # Full-extent, grid-invariant weight blocks: stay resident in VMEM.
        pl.BlockSpec(p.shape, lambda i: (0, 0, 0)) for p in params
    ]

    q = pl.pallas_call(
        _make_double_q_kernel(num_layers),
        out_shape=jax.ShapeDtypeStruct((b_pad, 2), jnp.float32),
        grid_spec=pltpu.PrefetchScalarGridSpec(
            num_scalar_prefetch=0,
            grid=grid,
            in_specs=in_specs,
            out_specs=pl.BlockSpec((tb, 2), lambda i: (i, 0)),
        ),
        compiler_params=pltpu.CompilerParams(
            dimension_semantics=("parallel",)),
    )(obs, action, *params)

    q = q[:B]
    return q[:, 0:1], q[:, 1:2]


def _build_params(key, obs_dim, action_dim, hidden_dim, hidden_depth):
    """Synthetic util.mlp parameters for both Q nets, stacked over nets.

    (util.weight_init uses orthogonal init with zero bias; the init scheme is
    irrelevant to forward semantics, so plain uniform init is used here.)
    """
    in_dim = obs_dim + action_dim
    if hidden_depth == 0:
        dims = [(in_dim, 1)]
    else:
        dims = ([(in_dim, hidden_dim)]
                + [(hidden_dim, hidden_dim)] * (hidden_depth - 1)
                + [(hidden_dim, 1)])

    params = []
    keys = jax.random.split(key, 2 * len(dims))
    for l, (din, dout) in enumerate(dims):
        bound = 1.0 / math.sqrt(din)
        w = jax.random.uniform(keys[2 * l], (2, din, dout),
                               minval=-bound, maxval=bound, dtype=jnp.float32)
        b = jax.random.uniform(keys[2 * l + 1], (2, 1, dout),
                               minval=-bound, maxval=bound, dtype=jnp.float32)
        if l == 0:
            # Split the first-layer weight so the kernel can fold the
            # obs/action concatenation into two matmuls on the same tile.
            params += [w[:, :obs_dim, :], w[:, obs_dim:, :], b]
        else:
            params += [w, b]
    return tuple(params)


def _reference_forward(obs, action, params):
    """Plain-JAX reference identical to the PyTorch forward."""
    num_layers = 1 + (len(params) - 3) // 2
    outs = []
    for n in range(2):
        h = obs @ params[0][n] + action @ params[1][n] + params[2][n]
        if num_layers > 1:
            h = jnp.maximum(h, 0.0)
        idx = 3
        for l in range(1, num_layers):
            h = h @ params[idx][n] + params[idx + 1][n]
            if l < num_layers - 1:
                h = jnp.maximum(h, 0.0)
            idx += 2
        outs.append(h)
    return outs[0], outs[1]


if __name__ == "__main__":
    # Small shapes consistent with a SAC critic.
    OBS_DIM, ACT_DIM, HIDDEN_DIM, HIDDEN_DEPTH, BATCH = 11, 3, 32, 2, 10

    key = jax.random.PRNGKey(0)
    k_params, k_obs, k_act = jax.random.split(key, 3)

    params = _build_params(k_params, OBS_DIM, ACT_DIM, HIDDEN_DIM, HIDDEN_DEPTH)
    obs = jax.random.normal(k_obs, (BATCH, OBS_DIM), dtype=jnp.float32)
    action = jax.random.uniform(k_act, (BATCH, ACT_DIM),
                                minval=-1.0, maxval=1.0, dtype=jnp.float32)

    r1, r2 = _reference_forward(obs, action, params)

    # Single-tile case (grid = 1).
    q1, q2 = double_q_forward(obs, action, params)
    q1 = jax.block_until_ready(q1)
    q2 = jax.block_until_ready(q2)
    assert q1.shape == (BATCH, 1) and q2.shape == (BATCH, 1)
    assert jnp.allclose(q1, r1, rtol=1e-4, atol=1e-5)
    assert jnp.allclose(q2, r2, rtol=1e-4, atol=1e-5)

    # Multi-tile case (grid = 2, exercises batch tiling + padding).
    t1, t2 = double_q_forward(obs, action, params, block_b=8)
    t1 = jax.block_until_ready(t1)
    t2 = jax.block_until_ready(t2)
    assert jnp.allclose(t1, r1, rtol=1e-4, atol=1e-5)
    assert jnp.allclose(t2, r2, rtol=1e-4, atol=1e-5)

    # TODO(synk): self.outputs['q1'/'q2'] logging dict is host-side bookkeeping
    # with no kernel equivalent; omitted.
    print("KERNEL_OK")
</pallas_src>

<mosaic_0001>
module attributes {stable_mosaic.version = 11 : i64} {
  func.func @kernel(%arg0: i32, %arg1: memref<16x11xf32, #tpu.memory_space<vmem>>, %arg2: memref<16x3xf32, #tpu.memory_space<vmem>>, %arg3: memref<2x11x32xf32, #tpu.memory_space<vmem>>, %arg4: memref<2x3x32xf32, #tpu.memory_space<vmem>>, %arg5: memref<2x1x32xf32, #tpu.memory_space<vmem>>, %arg6: memref<2x32x32xf32, #tpu.memory_space<vmem>>, %arg7: memref<2x1x32xf32, #tpu.memory_space<vmem>>, %arg8: memref<2x32x1xf32, #tpu.memory_space<vmem>>, %arg9: memref<2x1x1xf32, #tpu.memory_space<vmem>>, %arg10: memref<16x2xf32, #tpu.memory_space<vmem>>) attributes {dimension_semantics = [#tpu.dimension_semantics<parallel>], iteration_bounds = array<i64: 1>, scalar_prefetch = 0 : i64, scratch_operands = 0 : i64, tpu.core_type = #tpu.core_type<tc>, window_params = [{transform_indices = @transform_0, window_bounds = array<i64: 16, 11>}, {transform_indices = @transform_1, window_bounds = array<i64: 16, 3>}, {pipeline_mode = #tpu.pipeline_mode<synchronous>, transform_indices = @transform_2, window_bounds = array<i64: 2, 11, 32>}, {pipeline_mode = #tpu.pipeline_mode<synchronous>, transform_indices = @transform_3, window_bounds = array<i64: 2, 3, 32>}, {pipeline_mode = #tpu.pipeline_mode<synchronous>, transform_indices = @transform_4, window_bounds = array<i64: 2, 1, 32>}, {pipeline_mode = #tpu.pipeline_mode<synchronous>, transform_indices = @transform_5, window_bounds = array<i64: 2, 32, 32>}, {pipeline_mode = #tpu.pipeline_mode<synchronous>, transform_indices = @transform_6, window_bounds = array<i64: 2, 1, 32>}, {pipeline_mode = #tpu.pipeline_mode<synchronous>, transform_indices = @transform_7, window_bounds = array<i64: 2, 32, 1>}, {pipeline_mode = #tpu.pipeline_mode<synchronous>, transform_indices = @transform_8, window_bounds = array<i64: 2, 1, 1>}, {transform_indices = @transform_9, window_bounds = array<i64: 16, 2>}]} {
    %c0 = arith.constant 0 : index
    %c0_0 = arith.constant 0 : index
    %0 = vector.load %arg1[%c0, %c0_0] : memref<16x11xf32, #tpu.memory_space<vmem>>, vector<16x11xf32>
    %c0_1 = arith.constant 0 : index
    %c0_2 = arith.constant 0 : index
    %1 = vector.load %arg2[%c0_1, %c0_2] : memref<16x3xf32, #tpu.memory_space<vmem>>, vector<16x3xf32>
    %c0_3 = arith.constant 0 : index
    %c0_4 = arith.constant 0 : index
    %c0_5 = arith.constant 0 : index
    %2 = vector.load %arg3[%c0_3, %c0_4, %c0_5] : memref<2x11x32xf32, #tpu.memory_space<vmem>>, vector<1x11x32xf32>
    %3 = vector.shape_cast %2 : vector<1x11x32xf32> to vector<11x32xf32>
    %cst = arith.constant dense<0.000000e+00> : vector<16x32xf32>
    %4 = tpu.matmul %0, %3, %cst {dimension_numbers = #tpu.dot_dimension_numbers<[1], [0], [0], [1], [0, 0, 1, 1], [], []>} : vector<16x11xf32>, vector<11x32xf32>, vector<16x32xf32> -> vector<16x32xf32>
    %c0_6 = arith.constant 0 : index
    %c0_7 = arith.constant 0 : index
    %c0_8 = arith.constant 0 : index
    %5 = vector.load %arg4[%c0_6, %c0_7, %c0_8] : memref<2x3x32xf32, #tpu.memory_space<vmem>>, vector<1x3x32xf32>
    %6 = vector.shape_cast %5 : vector<1x3x32xf32> to vector<3x32xf32>
    %cst_9 = arith.constant dense<0.000000e+00> : vector<16x32xf32>
    %7 = tpu.matmul %1, %6, %cst_9 {dimension_numbers = #tpu.dot_dimension_numbers<[1], [0], [0], [1], [0, 0, 1, 1], [], []>} : vector<16x3xf32>, vector<3x32xf32>, vector<16x32xf32> -> vector<16x32xf32>
    %8 = arith.addf %4, %7 : vector<16x32xf32>
    %c0_10 = arith.constant 0 : index
    %c0_11 = arith.constant 0 : index
    %c0_12 = arith.constant 0 : index
    %9 = vector.load %arg5[%c0_10, %c0_11, %c0_12] : memref<2x1x32xf32, #tpu.memory_space<vmem>>, vector<1x1x32xf32>
    %10 = vector.shape_cast %9 : vector<1x1x32xf32> to vector<1x32xf32>
    %11 = vector.broadcast %10 : vector<1x32xf32> to vector<16x32xf32>
    %12 = arith.addf %8, %11 : vector<16x32xf32>
    %cst_13 = arith.constant 0.000000e+00 : f32
    %13 = vector.broadcast %cst_13 : f32 to vector<16x32xf32>
    %14 = arith.maximumf %12, %13 : vector<16x32xf32>
    %c0_14 = arith.constant 0 : index
    %c0_15 = arith.constant 0 : index
    %c0_16 = arith.constant 0 : index
    %15 = vector.load %arg6[%c0_14, %c0_15, %c0_16] : memref<2x32x32xf32, #tpu.memory_space<vmem>>, vector<1x32x32xf32>
    %16 = vector.shape_cast %15 : vector<1x32x32xf32> to vector<32x32xf32>
    %c0_17 = arith.constant 0 : index
    %c0_18 = arith.constant 0 : index
    %c0_19 = arith.constant 0 : index
    %17 = vector.load %arg7[%c0_17, %c0_18, %c0_19] : memref<2x1x32xf32, #tpu.memory_space<vmem>>, vector<1x1x32xf32>
    %18 = vector.shape_cast %17 : vector<1x1x32xf32> to vector<1x32xf32>
    %cst_20 = arith.constant dense<0.000000e+00> : vector<16x32xf32>
    %19 = tpu.matmul %14, %16, %cst_20 {dimension_numbers = #tpu.dot_dimension_numbers<[1], [0], [0], [1], [0, 0, 1, 1], [], []>} : vector<16x32xf32>, vector<32x32xf32>, vector<16x32xf32> -> vector<16x32xf32>
    %20 = vector.broadcast %18 : vector<1x32xf32> to vector<16x32xf32>
    %21 = arith.addf %19, %20 : vector<16x32xf32>
    %cst_21 = arith.constant 0.000000e+00 : f32
    %22 = vector.broadcast %cst_21 : f32 to vector<16x32xf32>
    %23 = arith.maximumf %21, %22 : vector<16x32xf32>
    %c0_22 = arith.constant 0 : index
    %c0_23 = arith.constant 0 : index
    %c0_24 = arith.constant 0 : index
    %24 = vector.load %arg8[%c0_22, %c0_23, %c0_24] : memref<2x32x1xf32, #tpu.memory_space<vmem>>, vector<1x32x1xf32>
    %25 = vector.shape_cast %24 : vector<1x32x1xf32> to vector<32x1xf32>
    %c0_25 = arith.constant 0 : index
    %c0_26 = arith.constant 0 : index
    %c0_27 = arith.constant 0 : index
    %26 = vector.load %arg9[%c0_25, %c0_26, %c0_27] : memref<2x1x1xf32, #tpu.memory_space<vmem>>, vector<1x1x1xf32>
    %27 = vector.shape_cast %26 : vector<1x1x1xf32> to vector<1x1xf32>
    %cst_28 = arith.constant dense<0.000000e+00> : vector<16x1xf32>
    %28 = tpu.matmul %23, %25, %cst_28 {dimension_numbers = #tpu.dot_dimension_numbers<[1], [0], [0], [1], [0, 0, 1, 1], [], []>} : vector<16x32xf32>, vector<32x1xf32>, vector<16x1xf32> -> vector<16x1xf32>
    %29 = vector.broadcast %27 : vector<1x1xf32> to vector<16x1xf32>
    %30 = arith.addf %28, %29 : vector<16x1xf32>
    %c0_29 = arith.constant 0 : index
    %c0_30 = arith.constant 0 : index
    %31 = vector.load %arg10[%c0_29, %c0_30] : memref<16x2xf32, #tpu.memory_space<vmem>>, vector<16x1xf32>
    tpu.vector_store %arg10[%c0_29, %c0_30], %30 {strides = array<i32>} : memref<16x2xf32, #tpu.memory_space<vmem>>, vector<16x1xf32>,
    %c1 = arith.constant 1 : index
    %c0_31 = arith.constant 0 : index
    %c0_32 = arith.constant 0 : index
    %32 = vector.load %arg3[%c1, %c0_31, %c0_32] : memref<2x11x32xf32, #tpu.memory_space<vmem>>, vector<1x11x32xf32>
    %33 = vector.shape_cast %32 : vector<1x11x32xf32> to vector<11x32xf32>
    %cst_33 = arith.constant dense<0.000000e+00> : vector<16x32xf32>
    %34 = tpu.matmul %0, %33, %cst_33 {dimension_numbers = #tpu.dot_dimension_numbers<[1], [0], [0], [1], [0, 0, 1, 1], [], []>} : vector<16x11xf32>, vector<11x32xf32>, vector<16x32xf32> -> vector<16x32xf32>
    %c1_34 = arith.constant 1 : index
    %c0_35 = arith.constant 0 : index
    %c0_36 = arith.constant 0 : index
    %35 = vector.load %arg4[%c1_34, %c0_35, %c0_36] : memref<2x3x32xf32, #tpu.memory_space<vmem>>, vector<1x3x32xf32>
    %36 = vector.shape_cast %35 : vector<1x3x32xf32> to vector<3x32xf32>
    %cst_37 = arith.constant dense<0.000000e+00> : vector<16x32xf32>
    %37 = tpu.matmul %1, %36, %cst_37 {dimension_numbers = #tpu.dot_dimension_numbers<[1], [0], [0], [1], [0, 0, 1, 1], [], []>} : vector<16x3xf32>, vector<3x32xf32>, vector<16x32xf32> -> vector<16x32xf32>
    %38 = arith.addf %34, %37 : vector<16x32xf32>
    %c1_38 = arith.constant 1 : index
    %c0_39 = arith.constant 0 : index
    %c0_40 = arith.constant 0 : index
    %39 = vector.load %arg5[%c1_38, %c0_39, %c0_40] : memref<2x1x32xf32, #tpu.memory_space<vmem>>, vector<1x1x32xf32>
    %40 = vector.shape_cast %39 : vector<1x1x32xf32> to vector<1x32xf32>
    %41 = vector.broadcast %40 : vector<1x32xf32> to vector<16x32xf32>
    %42 = arith.addf %38, %41 : vector<16x32xf32>
    %cst_41 = arith.constant 0.000000e+00 : f32
    %43 = vector.broadcast %cst_41 : f32 to vector<16x32xf32>
    %44 = arith.maximumf %42, %43 : vector<16x32xf32>
    %c1_42 = arith.constant 1 : index
    %c0_43 = arith.constant 0 : index
    %c0_44 = arith.constant 0 : index
    %45 = vector.load %arg6[%c1_42, %c0_43, %c0_44] : memref<2x32x32xf32, #tpu.memory_space<vmem>>, vector<1x32x32xf32>
    %46 = vector.shape_cast %45 : vector<1x32x32xf32> to vector<32x32xf32>
    %c1_45 = arith.constant 1 : index
    %c0_46 = arith.constant 0 : index
    %c0_47 = arith.constant 0 : index
    %47 = vector.load %arg7[%c1_45, %c0_46, %c0_47] : memref<2x1x32xf32, #tpu.memory_space<vmem>>, vector<1x1x32xf32>
    %48 = vector.shape_cast %47 : vector<1x1x32xf32> to vector<1x32xf32>
    %cst_48 = arith.constant dense<0.000000e+00> : vector<16x32xf32>
    %49 = tpu.matmul %44, %46, %cst_48 {dimension_numbers = #tpu.dot_dimension_numbers<[1], [0], [0], [1], [0, 0, 1, 1], [], []>} : vector<16x32xf32>, vector<32x32xf32>, vector<16x32xf32> -> vector<16x32xf32>
    %50 = vector.broadcast %48 : vector<1x32xf32> to vector<16x32xf32>
    %51 = arith.addf %49, %50 : vector<16x32xf32>
    %cst_49 = arith.constant 0.000000e+00 : f32
    %52 = vector.broadcast %cst_49 : f32 to vector<16x32xf32>
    %53 = arith.maximumf %51, %52 : vector<16x32xf32>
    %c1_50 = arith.constant 1 : index
    %c0_51 = arith.constant 0 : index
    %c0_52 = arith.constant 0 : index
    %54 = vector.load %arg8[%c1_50, %c0_51, %c0_52] : memref<2x32x1xf32, #tpu.memory_space<vmem>>, vector<1x32x1xf32>
    %55 = vector.shape_cast %54 : vector<1x32x1xf32> to vector<32x1xf32>
    %c1_53 = arith.constant 1 : index
    %c0_54 = arith.constant 0 : index
    %c0_55 = arith.constant 0 : index
    %56 = vector.load %arg9[%c1_53, %c0_54, %c0_55] : memref<2x1x1xf32, #tpu.memory_space<vmem>>, vector<1x1x1xf32>
    %57 = vector.shape_cast %56 : vector<1x1x1xf32> to vector<1x1xf32>
    %cst_56 = arith.constant dense<0.000000e+00> : vector<16x1xf32>
    %58 = tpu.matmul %53, %55, %cst_56 {dimension_numbers = #tpu.dot_dimension_numbers<[1], [0], [0], [1], [0, 0, 1, 1], [], []>} : vector<16x32xf32>, vector<32x1xf32>, vector<16x1xf32> -> vector<16x1xf32>
    %59 = vector.broadcast %57 : vector<1x1xf32> to vector<16x1xf32>
    %60 = arith.addf %58, %59 : vector<16x1xf32>
    %c0_57 = arith.constant 0 : index
    %c1_58 = arith.constant 1 : index
    %61 = vector.load %arg10[%c0_57, %c1_58] : memref<16x2xf32, #tpu.memory_space<vmem>>, vector<16x1xf32>
    tpu.vector_store %arg10[%c0_57, %c1_58], %60 {strides = array<i32>} : memref<16x2xf32, #tpu.memory_space<vmem>>, vector<16x1xf32>,
    return
  }
  func.func @transform_0(%arg0: i32) -> (i32, i32) {
    %c0_i32 = arith.constant 0 : i32
    %c0_i32_0 = arith.constant 0 : i32
    return %arg0, %c0_i32 : i32, i32
  }
  func.func @transform_1(%arg0: i32) -> (i32, i32) {
    %c0_i32 = arith.constant 0 : i32
    %c0_i32_0 = arith.constant 0 : i32
    return %arg0, %c0_i32 : i32, i32
  }
  func.func @transform_2(%arg0: i32) -> (i32, i32, i32) {
    %c0_i32 = arith.constant 0 : i32
    %c0_i32_0 = arith.constant 0 : i32
    %c0_i32_1 = arith.constant 0 : i32
    %c0_i32_2 = arith.constant 0 : i32
    return %c0_i32, %c0_i32_0, %c0_i32_1 : i32, i32, i32
  }
  func.func @transform_3(%arg0: i32) -> (i32, i32, i32) {
    %c0_i32 = arith.constant 0 : i32
    %c0_i32_0 = arith.constant 0 : i32
    %c0_i32_1 = arith.constant 0 : i32
    %c0_i32_2 = arith.constant 0 : i32
    return %c0_i32, %c0_i32_0, %c0_i32_1 : i32, i32, i32
  }
  func.func @transform_4(%arg0: i32) -> (i32, i32, i32) {
    %c0_i32 = arith.constant 0 : i32
    %c0_i32_0 = arith.constant 0 : i32
    %c0_i32_1 = arith.constant 0 : i32
    %c0_i32_2 = arith.constant 0 : i32
    return %c0_i32, %c0_i32_0, %c0_i32_1 : i32, i32, i32
  }
  func.func @transform_5(%arg0: i32) -> (i32, i32, i32) {
    %c0_i32 = arith.constant 0 : i32
    %c0_i32_0 = arith.constant 0 : i32
    %c0_i32_1 = arith.constant 0 : i32
    %c0_i32_2 = arith.constant 0 : i32
    return %c0_i32, %c0_i32_0, %c0_i32_1 : i32, i32, i32
  }
  func.func @transform_6(%arg0: i32) -> (i32, i32, i32) {
    %c0_i32 = arith.constant 0 : i32
    %c0_i32_0 = arith.constant 0 : i32
    %c0_i32_1 = arith.constant 0 : i32
    %c0_i32_2 = arith.constant 0 : i32
    return %c0_i32, %c0_i32_0, %c0_i32_1 : i32, i32, i32
  }
  func.func @transform_7(%arg0: i32) -> (i32, i32, i32) {
    %c0_i32 = arith.constant 0 : i32
    %c0_i32_0 = arith.constant 0 : i32
    %c0_i32_1 = arith.constant 0 : i32
    %c0_i32_2 = arith.constant 0 : i32
    return %c0_i32, %c0_i32_0, %c0_i32_1 : i32, i32, i32
  }
  func.func @transform_8(%arg0: i32) -> (i32, i32, i32) {
    %c0_i32 = arith.constant 0 : i32
    %c0_i32_0 = arith.constant 0 : i32
    %c0_i32_1 = arith.constant 0 : i32
    %c0_i32_2 = arith.constant 0 : i32
    return %c0_i32, %c0_i32_0, %c0_i32_1 : i32, i32, i32
  }
  func.func @transform_9(%arg0: i32) -> (i32, i32) {
    %c0_i32 = arith.constant 0 : i32
    %c0_i32_0 = arith.constant 0 : i32
    return %arg0, %c0_i32 : i32, i32
  }
}

</mosaic_0001>

<llo_original>
// kernel: double_q_forward.1
$region0: #{double_q_forward.1}
  #allocation0 [shape = 'u32[]', space=smem, size = 0x4, offset = 0x4, fixed_abs, tag = 'smem constant byte address 0x4 - core index']
  #allocation1 [shape = 'u32[72,128]{1,0:T(1,128)}', space=vmem, size = 0x9000, scoped, tag = 'internal scratch']
  %s0 = inlined_call_operand.vmem [shape: f32[16,11], index: 0, kind: input, shape index: {}]
  %s1 = inlined_call_operand.vmem [shape: f32[16,3], index: 1, kind: input, shape index: {}]
  %s2 = inlined_call_operand.vmem [shape: f32[2,11,32], index: 2, kind: input, shape index: {}]
  %s3 = inlined_call_operand.vmem [shape: f32[2,3,32], index: 3, kind: input, shape index: {}]
  %s4 = inlined_call_operand.vmem [shape: f32[2,1,32], index: 4, kind: input, shape index: {}]
  %s5 = inlined_call_operand.vmem [shape: f32[2,32,32], index: 5, kind: input, shape index: {}]
  %s6 = inlined_call_operand.vmem [shape: f32[2,1,32], index: 6, kind: input, shape index: {}]
  %s7 = inlined_call_operand.vmem [shape: f32[2,32,1], index: 7, kind: input, shape index: {}]
  %s8 = inlined_call_operand.vmem [shape: f32[2,1,1], index: 8, kind: input, shape index: {}]
  %s9 = inlined_call_operand.vmem [shape: f32[16,2], index: 9, kind: output, shape index: {}]
  %s10 = sld [smem:[#allocation0]]
  $region46: #{double_q_forward.1} parent=0
    _
  %s12 = ssub.s32 1, %s10
  %s13 = scalar_select 0, %s12, %s10
  // Predicated region
  $region2: #{double_q_forward.1} parent=0 // pred_check
    _
  $region3: #{double_q_forward.1} parent=0 // pred_check_branch
    %15 = sbr.rel (0) target = $region5
  $region4: #{double_q_forward.1} parent=0 // pred_region
    _
  $region5: #{double_q_forward.1} parent=0 // pred_fallthru
    _
  // Predicated region
  $region6: #{double_q_forward.1} parent=0 // pred_check
    _
  $region7: #{double_q_forward.1} parent=0 // pred_check_branch
    %17 = sbr.rel (0) target = $region9
  $region8: #{double_q_forward.1} parent=0 // pred_region
    _
  $region9: #{double_q_forward.1} parent=0 // pred_fallthru
    _
  // Predicated region
  $region10: #{double_q_forward.1} parent=0 // pred_check
    _
  $region11: #{double_q_forward.1} parent=0 // pred_check_branch
    %19 = sbr.rel (0) target = $region13
  $region12: #{double_q_forward.1} parent=0 // pred_region
    _
  $region13: #{double_q_forward.1} parent=0 // pred_fallthru
    _
  // Predicated region
  $region14: #{double_q_forward.1} parent=0 // pred_check
    _
  $region15: #{double_q_forward.1} parent=0 // pred_check_branch
    %21 = sbr.rel (0) target = $region17
  $region16: #{double_q_forward.1} parent=0 // pred_region
    _
  $region17: #{double_q_forward.1} parent=0 // pred_fallthru
    _
  // Predicated region
  $region18: #{double_q_forward.1} parent=0 // pred_check
    _
  $region19: #{double_q_forward.1} parent=0 // pred_check_branch
    %23 = sbr.rel (0) target = $region21
  $region20: #{double_q_forward.1} parent=0 // pred_region
    _
  $region21: #{double_q_forward.1} parent=0 // pred_fallthru
    _
  // Predicated region
  $region22: #{double_q_forward.1} parent=0 // pred_check
    _
  $region23: #{double_q_forward.1} parent=0 // pred_check_branch
    %25 = sbr.rel (0) target = $region25
  $region24: #{double_q_forward.1} parent=0 // pred_region
    _
  $region25: #{double_q_forward.1} parent=0 // pred_fallthru
    _
  // Predicated region
  $region26: #{double_q_forward.1} parent=0 // pred_check
    _
  $region27: #{double_q_forward.1} parent=0 // pred_check_branch
    %27 = sbr.rel (0) target = $region29
  $region28: #{double_q_forward.1} parent=0 // pred_region
    _
  $region29: #{double_q_forward.1} parent=0 // pred_fallthru
    _
  // Predicated region
  $region30: #{double_q_forward.1} parent=0 // pred_check
    _
  $region31: #{double_q_forward.1} parent=0 // pred_check_branch
    %29 = sbr.rel (0) target = $region33
  $region32: #{double_q_forward.1} parent=0 // pred_region
    _
  $region33: #{double_q_forward.1} parent=0 // pred_fallthru
    _
  // Predicated region
  $region34: #{double_q_forward.1} parent=0 // pred_check
    _
  $region35: #{double_q_forward.1} parent=0 // pred_check_branch
    %31 = sbr.rel (0) target = $region37
  $region36: #{double_q_forward.1} parent=0 // pred_region
    _
  $region37: #{double_q_forward.1} parent=0 // pred_fallthru
    _
  %v32 = vld [vmem:[%s0] sm:$0xff]
  %v33 = vld [vmem:[%s0 + $0x8] sm:$0xff]
  %v34 = vld [vmem:[%s1] sm:$0xff]
  %v35 = vld [vmem:[%s1 + $0x8] sm:$0xff]
  %v36 = vld [vmem:[%s2] sm:$0xff]
  %v37 = vld [vmem:[%s2 + $0x8] sm:$0x7]
  %v38 = vld [vmem:[%s3] sm:$0x7]
  %vm39 = vcmask 23552
  %v41 = vsel %vm39, %v34, 0
  %v44 = vsel %vm39, %v35, 0
  %vm46 = vcmask 1042432
  %v48 = vsel %vm46, %v38, 0
  %50 = vmatpush.msra.mxu0 0.0
  %51 = vmatpush.msra.mxu0 0.0
  %52 = vmatpush.msra.mxu0 0.0
  %53 = vmatpush.msra.mxu0 0.0
  %54 = vmatpush.msra.mxu0 0.0
  %55 = vmatpush.msra.mxu0 0.0
  %56 = vmatpush.msra.mxu0 0.0
  %57 = vmatpush.msra.mxu0 0.0
  %58 = vmatpush.msra.mxu0 0.0
  %59 = vmatpush.msra.mxu0 0.0
  %60 = vmatpush.msra.mxu0 0.0
  %61 = vmatpush.msra.mxu0 0.0
  %62 = vmatpush.msra.mxu0 0.0
  %63 = vmatpush.msra.mxu0 0.0
  %64 = vmatpush.msra.mxu0 0.0
  %65 = vmatpush.msra.mxu0 %v48
  %66 = vmatmul.f32.gmra.mxu0 %v41
  %v67 = vpop.f32.mrf.mxu0
  %v68 = vadd.f32 0.0, %v67
  %69 = vmatmul.f32.gmra.mxu0 %v44
  %v70 = vpop.f32.mrf.mxu0
  %v71 = vadd.f32 0.0, %v70
  %72 = vdwg.mxu0
  %vm73 = vcmask 89088
  %v75 = vsel %vm73, %v32, 0
  %v78 = vsel %vm73, %v33, 0
  %v81 = vsel %vm46, %v37, 0
  %83 = vmatpush.msra.mxu0 0.0
  %84 = vmatpush.msra.mxu0 0.0
  %85 = vmatpush.msra.mxu0 0.0
  %86 = vmatpush.msra.mxu0 0.0
  %87 = vmatpush.msra.mxu0 0.0
  %88 = vmatpush.msra.mxu0 0.0
  %89 = vmatpush.msra.mxu0 0.0
  %90 = vmatpush.msra.mxu0 0.0
  %91 = vmatpush.msra.mxu0 0.0
  %92 = vmatpush.msra.mxu0 0.0
  %93 = vmatpush.msra.mxu0 0.0
  %94 = vmatpush.msra.mxu0 0.0
  %95 = vmatpush.msra.mxu0 0.0
  %96 = vmatpush.msra.mxu0 0.0
  %97 = vmatpush.msra.mxu0 %v81
  %98 = vmatpush.msra.mxu0 %v36
  %99 = vmatmul.f32.gmra.mxu0 %v75
  %v100 = vpop.f32.mrf.mxu0
  %v101 = vadd.f32 %v68, %v100
  %102 = vmatmul.f32.gmra.mxu0 %v78
  %v103 = vpop.f32.mrf.mxu0
  %v104 = vadd.f32 %v71, %v103
  %105 = vdwg.mxu0
  %v106 = vld [vmem:[%s4] sm:$0x1]
  %v108 = vperm.slane %v106, 0
  %v110 = vadd.f32 %v101, %v108
  %v111 = vadd.f32 %v104, %v108
  %v112 = vmax.f32 %v110, 0.0
  %v113 = vmax.f32 %v111, 0.0
  %v114 = vld [vmem:[%s5] sm:$0xff]
  %v115 = vld [vmem:[%s5 + $0x8] sm:$0xff]
  %v116 = vld [vmem:[%s5 + $0x10] sm:$0xff]
  %v117 = vld [vmem:[%s5 + $0x18] sm:$0xff]
  %v118 = vld [vmem:[%s6] sm:$0x1]
  %v120 = vperm.slane %v118, 0
  %vm122 = vcmask 261120
  %v124 = vsel %vm122, %v112, 0
  %v127 = vsel %vm122, %v113, 0
  %129 = vmatpush.msra.mxu0 0.0
  %130 = vmatpush.msra.mxu0 0.0
  %131 = vmatpush.msra.mxu0 0.0
  %132 = vmatpush.msra.mxu0 0.0
  %133 = vmatpush.msra.mxu0 0.0
  %134 = vmatpush.msra.mxu0 0.0
  %135 = vmatpush.msra.mxu0 0.0
  %136 = vmatpush.msra.mxu0 0.0
  %137 = vmatpush.msra.mxu0 0.0
  %138 = vmatpush.msra.mxu0 0.0
  %139 = vmatpush.msra.mxu0 0.0
  %140 = vmatpush.msra.mxu0 0.0
  %141 = vmatpush.msra.mxu0 %v117
  %142 = vmatpush.msra.mxu0 %v116
  %143 = vmatpush.msra.mxu0 %v115
  %144 = vmatpush.msra.mxu0 %v114
  %145 = vmatmul.f32.gmra.mxu0 %v124
  %v146 = vpop.f32.mrf.mxu0
  %v147 = vadd.f32 %v120, %v146
  %148 = vmatmul.f32.gmra.mxu0 %v127
  %v149 = vpop.f32.mrf.mxu0
  %v150 = vadd.f32 %v120, %v149
  %151 = vdwg.mxu0
  %v152 = vmax.f32 %v147, 0.0
  %v153 = vmax.f32 %v150, 0.0
  %v154 = vld [vmem:[%s7] sm:$0xff]
  %v155 = vld [vmem:[%s7 + $0x8] sm:$0xff]
  %v156 = vld [vmem:[%s7 + $0x10] sm:$0xff]
  %v157 = vld [vmem:[%s7 + $0x18] sm:$0xff]
  %v158 = vld [vmem:[%s8] sm:$0x1]
  %v160 = vperm.slane %v158, 0
  %v163 = vsel %vm122, %v152, 0
  %v166 = vsel %vm122, %v153, 0
  %168 = vmatpush.msra.mxu0 0.0
  %169 = vmatpush.msra.mxu0 0.0
  %170 = vmatpush.msra.mxu0 0.0
  %171 = vmatpush.msra.mxu0 0.0
  %172 = vmatpush.msra.mxu0 0.0
  %173 = vmatpush.msra.mxu0 0.0
  %174 = vmatpush.msra.mxu0 0.0
  %175 = vmatpush.msra.mxu0 0.0
  %176 = vmatpush.msra.mxu0 0.0
  %177 = vmatpush.msra.mxu0 0.0
  %178 = vmatpush.msra.mxu0 0.0
  %179 = vmatpush.msra.mxu0 0.0
  %180 = vmatpush.msra.mxu0 %v157
  %181 = vmatpush.msra.mxu0 %v156
  %182 = vmatpush.msra.mxu0 %v155
  %183 = vmatpush.msra.mxu0 %v154
  %184 = vmatmul.f32.gmra.mxu0 %v163
  %v185 = vpop.f32.mrf.mxu0
  %v186 = vadd.f32 %v160, %v185
  %187 = vmatmul.f32.gmra.mxu0 %v166
  %v188 = vpop.f32.mrf.mxu0
  %v189 = vadd.f32 %v160, %v188
  %190 = vdwg.mxu0
  %vm191 = vcmask 7168
  %192 = vst.msk [vmem:[%s9] sm:$0xff] %vm191, %v186
  %193 = vst.msk [vmem:[%s9 + $0x8] sm:$0xff] %vm191, %v189
  %s194 = scalar_lea.vmem %s2, 16
  %v195 = vld [vmem:[%s194] sm:$0xff]
  %v196 = vld [vmem:[%s194 + $0x8] sm:$0x7]
  %s197 = scalar_lea.vmem %s3, 4
  %v198 = vld [vmem:[%s197] sm:$0x7]
  %v200 = vsel %vm46, %v198, 0
  %202 = vmatpush.msra.mxu0 0.0
  %203 = vmatpush.msra.mxu0 0.0
  %204 = vmatpush.msra.mxu0 0.0
  %205 = vmatpush.msra.mxu0 0.0
  %206 = vmatpush.msra.mxu0 0.0
  %207 = vmatpush.msra.mxu0 0.0
  %208 = vmatpush.msra.mxu0 0.0
  %209 = vmatpush.msra.mxu0 0.0
  %210 = vmatpush.msra.mxu0 0.0
  %211 = vmatpush.msra.mxu0 0.0
  %212 = vmatpush.msra.mxu0 0.0
  %213 = vmatpush.msra.mxu0 0.0
  %214 = vmatpush.msra.mxu0 0.0
  %215 = vmatpush.msra.mxu0 0.0
  %216 = vmatpush.msra.mxu0 0.0
  %217 = vmatpush.msra.mxu0 %v200
  %218 = vmatmul.f32.gmra.mxu0 %v41
  %v219 = vpop.f32.mrf.mxu0
  %v220 = vadd.f32 0.0, %v219
  %221 = vmatmul.f32.gmra.mxu0 %v44
  %v222 = vpop.f32.mrf.mxu0
  %v223 = vadd.f32 0.0, %v222
  %224 = vdwg.mxu0
  %v226 = vsel %vm46, %v196, 0
  %228 = vmatpush.msra.mxu0 0.0
  %229 = vmatpush.msra.mxu0 0.0
  %230 = vmatpush.msra.mxu0 0.0
  %231 = vmatpush.msra.mxu0 0.0
  %232 = vmatpush.msra.mxu0 0.0
  %233 = vmatpush.msra.mxu0 0.0
  %234 = vmatpush.msra.mxu0 0.0
  %235 = vmatpush.msra.mxu0 0.0
  %236 = vmatpush.msra.mxu0 0.0
  %237 = vmatpush.msra.mxu0 0.0
  %238 = vmatpush.msra.mxu0 0.0
  %239 = vmatpush.msra.mxu0 0.0
  %240 = vmatpush.msra.mxu0 0.0
  %241 = vmatpush.msra.mxu0 0.0
  %242 = vmatpush.msra.mxu0 %v226
  %243 = vmatpush.msra.mxu0 %v195
  %244 = vmatmul.f32.gmra.mxu0 %v75
  %v245 = vpop.f32.mrf.mxu0
  %v246 = vadd.f32 %v220, %v245
  %247 = vmatmul.f32.gmra.mxu0 %v78
  %v248 = vpop.f32.mrf.mxu0
  %v249 = vadd.f32 %v223, %v248
  %250 = vdwg.mxu0
  %s251 = scalar_lea.vmem %s4, 1
  %v252 = vld [vmem:[%s251] sm:$0x1]
  %v254 = vperm.slane %v252, 0
  %v256 = vadd.f32 %v246, %v254
  %v257 = vadd.f32 %v249, %v254
  %v258 = vmax.f32 %v256, 0.0
  %v259 = vmax.f32 %v257, 0.0
  %s260 = scalar_lea.vmem %s5, 32
  %v261 = vld [vmem:[%s260] sm:$0xff]
  %v262 = vld [vmem:[%s260 + $0x8] sm:$0xff]
  %v263 = vld [vmem:[%s260 + $0x10] sm:$0xff]
  %v264 = vld [vmem:[%s260 + $0x18] sm:$0xff]
  %s265 = scalar_lea.vmem %s6, 1
  %v266 = vld [vmem:[%s265] sm:$0x1]
  %v268 = vperm.slane %v266, 0
  %v271 = vsel %vm122, %v258, 0
  %v274 = vsel %vm122, %v259, 0
  %276 = vmatpush.msra.mxu0 0.0
  %277 = vmatpush.msra.mxu0 0.0
  %278 = vmatpush.msra.mxu0 0.0
  %279 = vmatpush.msra.mxu0 0.0
  %280 = vmatpush.msra.mxu0 0.0
  %281 = vmatpush.msra.mxu0 0.0
  %282 = vmatpush.msra.mxu0 0.0
  %283 = vmatpush.msra.mxu0 0.0
  %284 = vmatpush.msra.mxu0 0.0
  %285 = vmatpush.msra.mxu0 0.0
  %286 = vmatpush.msra.mxu0 0.0
  %287 = vmatpush.msra.mxu0 0.0
  %288 = vmatpush.msra.mxu0 %v264
  %289 = vmatpush.msra.mxu0 %v263
  %290 = vmatpush.msra.mxu0 %v262
  %291 = vmatpush.msra.mxu0 %v261
  %292 = vmatmul.f32.gmra.mxu0 %v271
  %v293 = vpop.f32.mrf.mxu0
  %v294 = vadd.f32 %v268, %v293
  %295 = vmatmul.f32.gmra.mxu0 %v274
  %v296 = vpop.f32.mrf.mxu0
  %v297 = vadd.f32 %v268, %v296
  %298 = vdwg.mxu0
  %v299 = vmax.f32 %v294, 0.0
  %v300 = vmax.f32 %v297, 0.0
  %s301 = scalar_lea.vmem %s7, 32
  %v302 = vld [vmem:[%s301] sm:$0xff]
  %v303 = vld [vmem:[%s301 + $0x8] sm:$0xff]
  %v304 = vld [vmem:[%s301 + $0x10] sm:$0xff]
  %v305 = vld [vmem:[%s301 + $0x18] sm:$0xff]
  %s306 = scalar_lea.vmem %s8, 1
  %v307 = vld [vmem:[%s306] sm:$0x1]
  %v309 = vperm.slane %v307, 0
  %v312 = vsel %vm122, %v299, 0
  %v315 = vsel %vm122, %v300, 0
  %317 = vmatpush.msra.mxu0 0.0
  %318 = vmatpush.msra.mxu0 0.0
  %319 = vmatpush.msra.mxu0 0.0
  %320 = vmatpush.msra.mxu0 0.0
  %321 = vmatpush.msra.mxu0 0.0
  %322 = vmatpush.msra.mxu0 0.0
  %323 = vmatpush.msra.mxu0 0.0
  %324 = vmatpush.msra.mxu0 0.0
  %325 = vmatpush.msra.mxu0 0.0
  %326 = vmatpush.msra.mxu0 0.0
  %327 = vmatpush.msra.mxu0 0.0
  %328 = vmatpush.msra.mxu0 0.0
  %329 = vmatpush.msra.mxu0 %v305
  %330 = vmatpush.msra.mxu0 %v304
  %331 = vmatpush.msra.mxu0 %v303
  %332 = vmatpush.msra.mxu0 %v302
  %333 = vmatmul.f32.gmra.mxu0 %v312
  %v334 = vpop.f32.mrf.mxu0
  %v335 = vadd.f32 %v309, %v334
  %336 = vmatmul.f32.gmra.mxu0 %v315
  %v337 = vpop.f32.mrf.mxu0
  %v338 = vadd.f32 %v309, %v337
  %339 = vdwg.mxu0
  %342 = vrot.lane.b32.xlu0 %v335, 1
  %v343 = vpop.permute.xlu0 %342
  %344 = vrot.lane.b32.xlu0 %v338, 1
  %v345 = vpop.permute.xlu0 %344
  %vm348 = vcmask 15368
  %349 = vst.msk [vmem:[%s9] sm:$0xff] %vm348, %v343
  %350 = vst.msk [vmem:[%s9 + $0x8] sm:$0xff] %vm348, %v345
  // Predicated region
  $region38: #{double_q_forward.1} parent=0 // pred_check
    _
  $region39: #{double_q_forward.1} parent=0 // pred_check_branch
    %352 = sbr.rel (0) target = $region41
  $region40: #{double_q_forward.1} parent=0 // pred_region
    _
  $region41: #{double_q_forward.1} parent=0 // pred_fallthru
    _
  // Predicated region
  $region42: #{double_q_forward.1} parent=0 // pred_check
    _
  $region43: #{double_q_forward.1} parent=0 // pred_check_branch
    %354 = sbr.rel (0) target = $region45
  $region44: #{double_q_forward.1} parent=0 // pred_region
    _
  $region45: #{double_q_forward.1} parent=0 // pred_fallthru
    _

</llo_original>
